<compile_context>
chip_gen: v7x
topology: tpu7x:2x2x1
jax: 0.10.0
libtpu: 0.0.40
codegen_flags: <defaults>
</compile_context>

<pallas_src>
import functools

import jax
import jax.numpy as jnp
from jax.experimental import pallas as pl
from jax.experimental.pallas import tpu as pltpu


def mha_kernel(x_ref, wqkv_ref, bqkv_ref, wp_ref, bp_ref, o_ref,
               qkv_scr, ctx_scr, *, num_heads, tokens):
    # x_ref block: (rows, C) = (batch_tile * N, C), f32.
    rows, C = x_ref.shape
    N = tokens
    Bt = rows // N
    D = C // num_heads

    # Fused QKV projection: one MXU pass. The attention scale is pre-folded
    # into the Q columns of wqkv/bqkv by prepare_mha_params(). Cast x to bf16
    # here (VPU) rather than in the wrapper.
    x = x_ref[...].astype(jnp.bfloat16)
    qkv = jnp.dot(x, wqkv_ref[...], preferred_element_type=jnp.float32)   # (rows, 3C)
    qkv = qkv + bqkv_ref[...]
    # Spill to bf16 VMEM scratch: bounds the live range across the head loop
    # and makes per-head q/k/v plain offset loads.
    qkv_scr[...] = qkv.astype(jnp.bfloat16)

    # Per-(batch, head) attention with plain 2-D matmuls (no batched einsums).
    for b in range(Bt):                      # static; Bt kept small by the wrapper
        r0 = b * N
        for h in range(num_heads):           # TODO(synk): lax.fori_loop if num_heads is large
            q = qkv_scr[r0:r0 + N, h * D:(h + 1) * D]                     # (N, D) bf16
            k = qkv_scr[r0:r0 + N, C + h * D:C + (h + 1) * D]             # (N, D) bf16
            v = qkv_scr[r0:r0 + N, 2 * C + h * D:2 * C + (h + 1) * D]     # (N, D) bf16

            # Scores (already scaled): contract D directly -> no k.T transpose.
            s = jax.lax.dot_general(q, k, (((1,), (1,)), ((), ())),
                                    preferred_element_type=jnp.float32)   # (N, N) f32
            s = s - jnp.max(s, axis=-1, keepdims=True)
            p = jnp.exp(s)
            p = p * pl.reciprocal(jnp.sum(p, axis=-1, keepdims=True), approx=True)
            # TODO(synk): attention dropout (p=0.1) omitted — identity in eval mode.

            ctx = jnp.dot(p.astype(jnp.bfloat16), v,
                          preferred_element_type=jnp.float32)             # (N, D) f32
            # Assemble heads into a lane-dense (rows, C) slab for one grouped
            # output projection (full-C MXU contraction instead of H D-deep dots).
            ctx_scr[r0:r0 + N, h * D:(h + 1) * D] = ctx

    out = jnp.dot(ctx_scr[...].astype(jnp.bfloat16), wp_ref[...],
                  preferred_element_type=jnp.float32)                     # (rows, C)
    out = out + bp_ref[...]
    # TODO(synk): projection dropout (p=0.1) omitted — identity in eval mode.
    o_ref[...] = out.astype(o_ref.dtype)


def prepare_mha_params(w_qkv, b_qkv, w_proj, b_proj, *, num_heads):
    """Once-per-model weight prep (hoisted out of the per-call hot path).

    PyTorch nn.Linear layout: w_qkv (3C, C), b_qkv (3C,), w_proj (C, C),
    b_proj (C,). Returns (wqkv, bqkv, wp, bp) with the 1/sqrt(D) attention
    scale folded into the Q third of the fused weight/bias.
    """
    C = w_proj.shape[0]
    D = C // num_heads
    scale = 1.0 / (D ** 0.5)
    col_scale = jnp.concatenate([jnp.full((C,), scale, jnp.float32),
                                 jnp.ones((2 * C,), jnp.float32)])
    wqkv = (jnp.transpose(w_qkv).astype(jnp.float32)
            * col_scale[None, :]).astype(jnp.bfloat16)                   # (C, 3C) bf16
    bqkv = (b_qkv.astype(jnp.float32) * col_scale).reshape(1, 3 * C)     # f32
    wp = jnp.transpose(w_proj).astype(jnp.bfloat16)                      # (C, C) bf16
    bp = b_proj.astype(jnp.float32).reshape(1, C)                        # f32
    return wqkv, bqkv, wp, bp


_VMEM_BUDGET = 40 * 1024 * 1024  # conservative: fits v7x's 64 MiB with headroom


def _tile_vmem_bytes(bt, N, C):
    rows = bt * N
    x_bytes = 2 * rows * C * 4                      # f32 input, double-buffered
    out_bytes = 2 * rows * C * 4                    # f32 output, double-buffered
    scr_bytes = rows * 3 * C * 2 + rows * C * 4     # bf16 qkv + f32 ctx scratch
    w_bytes = 2 * (C * 3 * C * 2 + C * C * 2 + 3 * C * 4 + C * 4)
    return x_bytes + out_bytes + scr_bytes + w_bytes


def _pick_batch_tile(B, N, C):
    """Largest divisor of B giving >=2 grid steps (pipelining + v7x megacore),
    an 8-aligned row tile, and a tile within the VMEM budget. Falls back to a
    single full-array step if no such tiling exists."""
    for bt in range(B // 2, 0, -1):
        if B % bt:
            continue
        if (bt * N) % 8:
            continue
        if _tile_vmem_bytes(bt, N, C) <= _VMEM_BUDGET:
            return bt
    return B


def multi_head_attention(x, params, *, num_heads, batch_tile=None):
    """x: (B, N, C) float32. params: output of prepare_mha_params()."""
    wqkv, bqkv, wp, bp = params
    B, N, C = x.shape
    assert C % num_heads == 0

    if batch_tile is None:
        batch_tile = _pick_batch_tile(B, N, C)
    assert B % batch_tile == 0
    rows = batch_tile * N

    x2 = x.reshape(B * N, C)      # no dtype cast here: the kernel casts on the VPU

    kernel = functools.partial(mha_kernel, num_heads=num_heads, tokens=N)

    out2 = pl.pallas_call(
        kernel,
        out_shape=jax.ShapeDtypeStruct((B * N, C), x.dtype),
        grid=(B // batch_tile,),
        in_specs=[
            pl.BlockSpec((rows, C), lambda b: (b, 0)),        # x row block (f32)
            pl.BlockSpec((C, 3 * C), lambda b: (0, 0)),       # fused qkv weight (bf16)
            pl.BlockSpec((1, 3 * C), lambda b: (0, 0)),       # fused qkv bias (f32)
            pl.BlockSpec((C, C), lambda b: (0, 0)),           # proj weight (bf16)
            pl.BlockSpec((1, C), lambda b: (0, 0)),           # proj bias (f32)
        ],
        out_specs=pl.BlockSpec((rows, C), lambda b: (b, 0)),
        scratch_shapes=[
            pltpu.VMEM((rows, 3 * C), jnp.bfloat16),          # qkv spill (bf16)
            pltpu.VMEM((rows, C), jnp.float32),               # per-head ctx slab
        ],
        compiler_params=pltpu.CompilerParams(
            dimension_semantics=("parallel",),
            vmem_limit_bytes=48 * 1024 * 1024),
    )(x2, wqkv, bqkv, wp, bp)

    return out2.reshape(B, N, C)


def mha_reference(x, w_qkv, b_qkv, w_proj, b_proj, *, num_heads):
    """Pure-JAX f32 reference mirroring the PyTorch forward (eval mode)."""
    B, N, C = x.shape
    D = C // num_heads
    qkv = x @ w_qkv.T + b_qkv                                # (B, N, 3C)
    qkv = qkv.reshape(B, N, 3, num_heads, D).transpose(2, 0, 3, 1, 4)
    q, k, v = qkv[0], qkv[1], qkv[2]                         # (B, H, N, D)
    attn = (q @ jnp.swapaxes(k, -2, -1)) / (D ** 0.5)
    attn = jax.nn.softmax(attn, axis=-1)
    out = attn @ v                                           # (B, H, N, D)
    out = jnp.swapaxes(out, 1, 2).reshape(B, N, C)
    return out @ w_proj.T + b_proj


if __name__ == "__main__":
    B, N, C = 2, 8, 32
    num_heads = 4

    key = jax.random.PRNGKey(0)
    kx, kw1, kb1, kw2, kb2 = jax.random.split(key, 5)

    x = jax.random.normal(kx, (B, N, C), dtype=jnp.float32)
    # deterministic synthetic parameters (PyTorch Linear shapes: (out, in))
    w_qkv = jax.random.normal(kw1, (3 * C, C), dtype=jnp.float32) * 0.05
    b_qkv = jax.random.normal(kb1, (3 * C,), dtype=jnp.float32) * 0.05
    w_proj = jax.random.normal(kw2, (C, C), dtype=jnp.float32) * 0.05
    b_proj = jax.random.normal(kb2, (C,), dtype=jnp.float32) * 0.05

    # Weight prep is hoisted out of the per-call path (once per model).
    params = prepare_mha_params(w_qkv, b_qkv, w_proj, b_proj, num_heads=num_heads)

    out = multi_head_attention(x, params, num_heads=num_heads)
    out = jax.block_until_ready(out)

    ref = mha_reference(x, w_qkv, b_qkv, w_proj, b_proj, num_heads=num_heads)
    assert out.shape == (B, N, C)
    # bf16 MXU operands + approx reciprocal -> relaxed tolerance vs f32 reference.
    assert jnp.allclose(out, ref, atol=2e-2, rtol=2e-2), "mismatch vs reference"

    print("KERNEL_OK")
</pallas_src>

<mosaic_0001>
module attributes {stable_mosaic.version = 11 : i64} {
  func.func @mha_kernel(%arg0: i32, %arg1: memref<8x32xf32, #tpu.memory_space<vmem>>, %arg2: memref<32x96xbf16, #tpu.memory_space<vmem>>, %arg3: memref<1x96xf32, #tpu.memory_space<vmem>>, %arg4: memref<32x32xbf16, #tpu.memory_space<vmem>>, %arg5: memref<1x32xf32, #tpu.memory_space<vmem>>, %arg6: memref<8x32xf32, #tpu.memory_space<vmem>>, %arg7: memref<8x96xbf16, #tpu.memory_space<vmem>>, %arg8: memref<8x32xf32, #tpu.memory_space<vmem>>) attributes {dimension_semantics = [#tpu.dimension_semantics<parallel>], iteration_bounds = array<i64: 2>, scalar_prefetch = 0 : i64, scratch_operands = 2 : i64, tpu.core_type = #tpu.core_type<tc>, window_params = [{transform_indices = @transform_0, window_bounds = array<i64: 8, 32>}, {pipeline_mode = #tpu.pipeline_mode<synchronous>, transform_indices = @transform_1, window_bounds = array<i64: 32, 96>}, {pipeline_mode = #tpu.pipeline_mode<synchronous>, transform_indices = @transform_2, window_bounds = array<i64: 1, 96>}, {pipeline_mode = #tpu.pipeline_mode<synchronous>, transform_indices = @transform_3, window_bounds = array<i64: 32, 32>}, {pipeline_mode = #tpu.pipeline_mode<synchronous>, transform_indices = @transform_4, window_bounds = array<i64: 1, 32>}, {transform_indices = @transform_5, window_bounds = array<i64: 8, 32>}]} {
    %c0 = arith.constant 0 : index
    %c0_0 = arith.constant 0 : index
    %0 = vector.load %arg1[%c0, %c0_0] : memref<8x32xf32, #tpu.memory_space<vmem>>, vector<8x32xf32>
    %1 = arith.truncf %0 : vector<8x32xf32> to vector<8x32xbf16>
    %c0_1 = arith.constant 0 : index
    %c0_2 = arith.constant 0 : index
    %2 = vector.load %arg2[%c0_1, %c0_2] : memref<32x96xbf16, #tpu.memory_space<vmem>>, vector<32x96xbf16>
    %cst = arith.constant dense<0.000000e+00> : vector<8x96xf32>
    %3 = tpu.matmul %1, %2, %cst {dimension_numbers = #tpu.dot_dimension_numbers<[1], [0], [0], [1], [0, 0, 1, 1], [], []>} : vector<8x32xbf16>, vector<32x96xbf16>, vector<8x96xf32> -> vector<8x96xf32>
    %c0_3 = arith.constant 0 : index
    %c0_4 = arith.constant 0 : index
    %4 = vector.load %arg3[%c0_3, %c0_4] : memref<1x96xf32, #tpu.memory_space<vmem>>, vector<1x96xf32>
    %5 = vector.broadcast %4 : vector<1x96xf32> to vector<8x96xf32>
    %6 = arith.addf %3, %5 : vector<8x96xf32>
    %7 = arith.truncf %6 : vector<8x96xf32> to vector<8x96xbf16>
    %c0_5 = arith.constant 0 : index
    %c0_6 = arith.constant 0 : index
    %8 = vector.load %arg7[%c0_5, %c0_6] : memref<8x96xbf16, #tpu.memory_space<vmem>>, vector<8x96xbf16>
    tpu.vector_store %arg7[%c0_5, %c0_6], %7 {strides = array<i32>} : memref<8x96xbf16, #tpu.memory_space<vmem>>, vector<8x96xbf16>,
    %c0_7 = arith.constant 0 : index
    %c0_8 = arith.constant 0 : index
    %9 = vector.load %arg7[%c0_7, %c0_8] : memref<8x96xbf16, #tpu.memory_space<vmem>>, vector<8x8xbf16>
    %c0_9 = arith.constant 0 : index
    %c32 = arith.constant 32 : index
    %10 = vector.load %arg7[%c0_9, %c32] : memref<8x96xbf16, #tpu.memory_space<vmem>>, vector<8x8xbf16>
    %c0_10 = arith.constant 0 : index
    %c64 = arith.constant 64 : index
    %11 = vector.load %arg7[%c0_10, %c64] : memref<8x96xbf16, #tpu.memory_space<vmem>>, vector<8x8xbf16>
    %cst_11 = arith.constant dense<0.000000e+00> : vector<8x8xf32>
    %12 = tpu.matmul %9, %10, %cst_11 {dimension_numbers = #tpu.dot_dimension_numbers<[1], [1], [0], [0], [0, 0, 1, 0], [], []>} : vector<8x8xbf16>, vector<8x8xbf16>, vector<8x8xf32> -> vector<8x8xf32>
    %cst_12 = arith.constant dense<0xFF800000> : vector<8xf32>
    %13 = vector.multi_reduction <maximumf>, %12, %cst_12 [1] : vector<8x8xf32> to vector<8xf32>
    %14 = vector.shape_cast %13 : vector<8xf32> to vector<8x1xf32>
    %15 = vector.broadcast %14 : vector<8x1xf32> to vector<8x8xf32>
    %16 = arith.subf %12, %15 : vector<8x8xf32>
    %17 = math.exp %16 : vector<8x8xf32>
    %cst_13 = arith.constant dense<0.000000e+00> : vector<8xf32>
    %18 = vector.multi_reduction <add>, %17, %cst_13 [1] : vector<8x8xf32> to vector<8xf32>
    %19 = vector.shape_cast %18 : vector<8xf32> to vector<8x1xf32>
    %20 = tpu.reciprocal %19 {approx = true} : vector<8x1xf32> -> vector<8x1xf32>
    %21 = vector.broadcast %20 : vector<8x1xf32> to vector<8x8xf32>
    %22 = arith.mulf %17, %21 : vector<8x8xf32>
    %23 = arith.truncf %22 : vector<8x8xf32> to vector<8x8xbf16>
    %cst_14 = arith.constant dense<0.000000e+00> : vector<8x8xf32>
    %24 = tpu.matmul %23, %11, %cst_14 {dimension_numbers = #tpu.dot_dimension_numbers<[1], [0], [0], [1], [0, 0, 1, 1], [], []>} : vector<8x8xbf16>, vector<8x8xbf16>, vector<8x8xf32> -> vector<8x8xf32>
    %c0_15 = arith.constant 0 : index
    %c0_16 = arith.constant 0 : index
    %25 = vector.load %arg8[%c0_15, %c0_16] : memref<8x32xf32, #tpu.memory_space<vmem>>, vector<8x8xf32>
    tpu.vector_store %arg8[%c0_15, %c0_16], %24 {strides = array<i32>} : memref<8x32xf32, #tpu.memory_space<vmem>>, vector<8x8xf32>,
    %c0_17 = arith.constant 0 : index
    %c8 = arith.constant 8 : index
    %26 = vector.load %arg7[%c0_17, %c8] : memref<8x96xbf16, #tpu.memory_space<vmem>>, vector<8x8xbf16>
    %c0_18 = arith.constant 0 : index
    %c40 = arith.constant 40 : index
    %27 = vector.load %arg7[%c0_18, %c40] : memref<8x96xbf16, #tpu.memory_space<vmem>>, vector<8x8xbf16>
    %c0_19 = arith.constant 0 : index
    %c72 = arith.constant 72 : index
    %28 = vector.load %arg7[%c0_19, %c72] : memref<8x96xbf16, #tpu.memory_space<vmem>>, vector<8x8xbf16>
    %cst_20 = arith.constant dense<0.000000e+00> : vector<8x8xf32>
    %29 = tpu.matmul %26, %27, %cst_20 {dimension_numbers = #tpu.dot_dimension_numbers<[1], [1], [0], [0], [0, 0, 1, 0], [], []>} : vector<8x8xbf16>, vector<8x8xbf16>, vector<8x8xf32> -> vector<8x8xf32>
    %cst_21 = arith.constant dense<0xFF800000> : vector<8xf32>
    %30 = vector.multi_reduction <maximumf>, %29, %cst_21 [1] : vector<8x8xf32> to vector<8xf32>
    %31 = vector.shape_cast %30 : vector<8xf32> to vector<8x1xf32>
    %32 = vector.broadcast %31 : vector<8x1xf32> to vector<8x8xf32>
    %33 = arith.subf %29, %32 : vector<8x8xf32>
    %34 = math.exp %33 : vector<8x8xf32>
    %cst_22 = arith.constant dense<0.000000e+00> : vector<8xf32>
    %35 = vector.multi_reduction <add>, %34, %cst_22 [1] : vector<8x8xf32> to vector<8xf32>
    %36 = vector.shape_cast %35 : vector<8xf32> to vector<8x1xf32>
    %37 = tpu.reciprocal %36 {approx = true} : vector<8x1xf32> -> vector<8x1xf32>
    %38 = vector.broadcast %37 : vector<8x1xf32> to vector<8x8xf32>
    %39 = arith.mulf %34, %38 : vector<8x8xf32>
    %40 = arith.truncf %39 : vector<8x8xf32> to vector<8x8xbf16>
    %cst_23 = arith.constant dense<0.000000e+00> : vector<8x8xf32>
    %41 = tpu.matmul %40, %28, %cst_23 {dimension_numbers = #tpu.dot_dimension_numbers<[1], [0], [0], [1], [0, 0, 1, 1], [], []>} : vector<8x8xbf16>, vector<8x8xbf16>, vector<8x8xf32> -> vector<8x8xf32>
    %c0_24 = arith.constant 0 : index
    %c8_25 = arith.constant 8 : index
    %42 = vector.load %arg8[%c0_24, %c8_25] : memref<8x32xf32, #tpu.memory_space<vmem>>, vector<8x8xf32>
    tpu.vector_store %arg8[%c0_24, %c8_25], %41 {strides = array<i32>} : memref<8x32xf32, #tpu.memory_space<vmem>>, vector<8x8xf32>,
    %c0_26 = arith.constant 0 : index
    %c16 = arith.constant 16 : index
    %43 = vector.load %arg7[%c0_26, %c16] : memref<8x96xbf16, #tpu.memory_space<vmem>>, vector<8x8xbf16>
    %c0_27 = arith.constant 0 : index
    %c48 = arith.constant 48 : index
    %44 = vector.load %arg7[%c0_27, %c48] : memref<8x96xbf16, #tpu.memory_space<vmem>>, vector<8x8xbf16>
    %c0_28 = arith.constant 0 : index
    %c80 = arith.constant 80 : index
    %45 = vector.load %arg7[%c0_28, %c80] : memref<8x96xbf16, #tpu.memory_space<vmem>>, vector<8x8xbf16>
    %cst_29 = arith.constant dense<0.000000e+00> : vector<8x8xf32>
    %46 = tpu.matmul %43, %44, %cst_29 {dimension_numbers = #tpu.dot_dimension_numbers<[1], [1], [0], [0], [0, 0, 1, 0], [], []>} : vector<8x8xbf16>, vector<8x8xbf16>, vector<8x8xf32> -> vector<8x8xf32>
    %cst_30 = arith.constant dense<0xFF800000> : vector<8xf32>
    %47 = vector.multi_reduction <maximumf>, %46, %cst_30 [1] : vector<8x8xf32> to vector<8xf32>
    %48 = vector.shape_cast %47 : vector<8xf32> to vector<8x1xf32>
    %49 = vector.broadcast %48 : vector<8x1xf32> to vector<8x8xf32>
    %50 = arith.subf %46, %49 : vector<8x8xf32>
    %51 = math.exp %50 : vector<8x8xf32>
    %cst_31 = arith.constant dense<0.000000e+00> : vector<8xf32>
    %52 = vector.multi_reduction <add>, %51, %cst_31 [1] : vector<8x8xf32> to vector<8xf32>
    %53 = vector.shape_cast %52 : vector<8xf32> to vector<8x1xf32>
    %54 = tpu.reciprocal %53 {approx = true} : vector<8x1xf32> -> vector<8x1xf32>
    %55 = vector.broadcast %54 : vector<8x1xf32> to vector<8x8xf32>
    %56 = arith.mulf %51, %55 : vector<8x8xf32>
    %57 = arith.truncf %56 : vector<8x8xf32> to vector<8x8xbf16>
    %cst_32 = arith.constant dense<0.000000e+00> : vector<8x8xf32>
    %58 = tpu.matmul %57, %45, %cst_32 {dimension_numbers = #tpu.dot_dimension_numbers<[1], [0], [0], [1], [0, 0, 1, 1], [], []>} : vector<8x8xbf16>, vector<8x8xbf16>, vector<8x8xf32> -> vector<8x8xf32>
    %c0_33 = arith.constant 0 : index
    %c16_34 = arith.constant 16 : index
    %59 = vector.load %arg8[%c0_33, %c16_34] : memref<8x32xf32, #tpu.memory_space<vmem>>, vector<8x8xf32>
    tpu.vector_store %arg8[%c0_33, %c16_34], %58 {strides = array<i32>} : memref<8x32xf32, #tpu.memory_space<vmem>>, vector<8x8xf32>,
    %c0_35 = arith.constant 0 : index
    %c24 = arith.constant 24 : index
    %60 = vector.load %arg7[%c0_35, %c24] : memref<8x96xbf16, #tpu.memory_space<vmem>>, vector<8x8xbf16>
    %c0_36 = arith.constant 0 : index
    %c56 = arith.constant 56 : index
    %61 = vector.load %arg7[%c0_36, %c56] : memref<8x96xbf16, #tpu.memory_space<vmem>>, vector<8x8xbf16>
    %c0_37 = arith.constant 0 : index
    %c88 = arith.constant 88 : index
    %62 = vector.load %arg7[%c0_37, %c88] : memref<8x96xbf16, #tpu.memory_space<vmem>>, vector<8x8xbf16>
    %cst_38 = arith.constant dense<0.000000e+00> : vector<8x8xf32>
    %63 = tpu.matmul %60, %61, %cst_38 {dimension_numbers = #tpu.dot_dimension_numbers<[1], [1], [0], [0], [0, 0, 1, 0], [], []>} : vector<8x8xbf16>, vector<8x8xbf16>, vector<8x8xf32> -> vector<8x8xf32>
    %cst_39 = arith.constant dense<0xFF800000> : vector<8xf32>
    %64 = vector.multi_reduction <maximumf>, %63, %cst_39 [1] : vector<8x8xf32> to vector<8xf32>
    %65 = vector.shape_cast %64 : vector<8xf32> to vector<8x1xf32>
    %66 = vector.broadcast %65 : vector<8x1xf32> to vector<8x8xf32>
    %67 = arith.subf %63, %66 : vector<8x8xf32>
    %68 = math.exp %67 : vector<8x8xf32>
    %cst_40 = arith.constant dense<0.000000e+00> : vector<8xf32>
    %69 = vector.multi_reduction <add>, %68, %cst_40 [1] : vector<8x8xf32> to vector<8xf32>
    %70 = vector.shape_cast %69 : vector<8xf32> to vector<8x1xf32>
    %71 = tpu.reciprocal %70 {approx = true} : vector<8x1xf32> -> vector<8x1xf32>
    %72 = vector.broadcast %71 : vector<8x1xf32> to vector<8x8xf32>
    %73 = arith.mulf %68, %72 : vector<8x8xf32>
    %74 = arith.truncf %73 : vector<8x8xf32> to vector<8x8xbf16>
    %cst_41 = arith.constant dense<0.000000e+00> : vector<8x8xf32>
    %75 = tpu.matmul %74, %62, %cst_41 {dimension_numbers = #tpu.dot_dimension_numbers<[1], [0], [0], [1], [0, 0, 1, 1], [], []>} : vector<8x8xbf16>, vector<8x8xbf16>, vector<8x8xf32> -> vector<8x8xf32>
    %c0_42 = arith.constant 0 : index
    %c24_43 = arith.constant 24 : index
    %76 = vector.load %arg8[%c0_42, %c24_43] : memref<8x32xf32, #tpu.memory_space<vmem>>, vector<8x8xf32>
    tpu.vector_store %arg8[%c0_42, %c24_43], %75 {strides = array<i32>} : memref<8x32xf32, #tpu.memory_space<vmem>>, vector<8x8xf32>,
    %c0_44 = arith.constant 0 : index
    %c0_45 = arith.constant 0 : index
    %77 = vector.load %arg8[%c0_44, %c0_45] : memref<8x32xf32, #tpu.memory_space<vmem>>, vector<8x32xf32>
    %78 = arith.truncf %77 : vector<8x32xf32> to vector<8x32xbf16>
    %c0_46 = arith.constant 0 : index
    %c0_47 = arith.constant 0 : index
    %79 = vector.load %arg4[%c0_46, %c0_47] : memref<32x32xbf16, #tpu.memory_space<vmem>>, vector<32x32xbf16>
    %cst_48 = arith.constant dense<0.000000e+00> : vector<8x32xf32>
    %80 = tpu.matmul %78, %79, %cst_48 {dimension_numbers = #tpu.dot_dimension_numbers<[1], [0], [0], [1], [0, 0, 1, 1], [], []>} : vector<8x32xbf16>, vector<32x32xbf16>, vector<8x32xf32> -> vector<8x32xf32>
    %c0_49 = arith.constant 0 : index
    %c0_50 = arith.constant 0 : index
    %81 = vector.load %arg5[%c0_49, %c0_50] : memref<1x32xf32, #tpu.memory_space<vmem>>, vector<1x32xf32>
    %82 = vector.broadcast %81 : vector<1x32xf32> to vector<8x32xf32>
    %83 = arith.addf %80, %82 : vector<8x32xf32>
    %c0_51 = arith.constant 0 : index
    %c0_52 = arith.constant 0 : index
    %84 = vector.load %arg6[%c0_51, %c0_52] : memref<8x32xf32, #tpu.memory_space<vmem>>, vector<8x32xf32>
    tpu.vector_store %arg6[%c0_51, %c0_52], %83 {strides = array<i32>} : memref<8x32xf32, #tpu.memory_space<vmem>>, vector<8x32xf32>,
    return
  }
  func.func @transform_0(%arg0: i32) -> (i32, i32) {
    %c0_i32 = arith.constant 0 : i32
    %c0_i32_0 = arith.constant 0 : i32
    return %arg0, %c0_i32 : i32, i32
  }
  func.func @transform_1(%arg0: i32) -> (i32, i32) {
    %c0_i32 = arith.constant 0 : i32
    %c0_i32_0 = arith.constant 0 : i32
    %c0_i32_1 = arith.constant 0 : i32
    return %c0_i32, %c0_i32_0 : i32, i32
  }
  func.func @transform_2(%arg0: i32) -> (i32, i32) {
    %c0_i32 = arith.constant 0 : i32
    %c0_i32_0 = arith.constant 0 : i32
    %c0_i32_1 = arith.constant 0 : i32
    return %c0_i32, %c0_i32_0 : i32, i32
  }
  func.func @transform_3(%arg0: i32) -> (i32, i32) {
    %c0_i32 = arith.constant 0 : i32
    %c0_i32_0 = arith.constant 0 : i32
    %c0_i32_1 = arith.constant 0 : i32
    return %c0_i32, %c0_i32_0 : i32, i32
  }
  func.func @transform_4(%arg0: i32) -> (i32, i32) {
    %c0_i32 = arith.constant 0 : i32
    %c0_i32_0 = arith.constant 0 : i32
    %c0_i32_1 = arith.constant 0 : i32
    return %c0_i32, %c0_i32_0 : i32, i32
  }
  func.func @transform_5(%arg0: i32) -> (i32, i32) {
    %c0_i32 = arith.constant 0 : i32
    %c0_i32_0 = arith.constant 0 : i32
    return %arg0, %c0_i32 : i32, i32
  }
}

</mosaic_0001>

<llo_original>
// kernel: tpu_custom_call.1
$region0: #{tpu_custom_call.1}
  #allocation0 [shape = 'u32[]', space=smem, size = 0x4, offset = 0x4, fixed_abs, tag = 'smem constant byte address 0x4 - core index']
  #allocation1 [shape = 'u32[144,128]{1,0:T(1,128)}', space=vmem, size = 0x12000, scoped, tag = 'internal scratch']
  #allocation2 [shape = 'bf16[8,96]{1,0:T(8,128)(2,1)}', space=vmem, size = 0x800, scoped, tag = 'scratch operand']
  #allocation3 [shape = 'f32[8,32]{1,0:T(8,128)}', space=vmem, size = 0x1000, scoped, tag = 'scratch operand']
  %s0 = inlined_call_operand.hbm [shape: f32[16,32], index: 0, kind: input, shape index: {}]
  %s1 = inlined_call_operand.hbm [shape: bf16[32,96], index: 1, kind: input, shape index: {}]
  %s2 = inlined_call_operand.vmem [shape: f32[1,96], index: 2, kind: input, shape index: {}]
  %s3 = inlined_call_operand.hbm [shape: bf16[32,32], index: 3, kind: input, shape index: {}]
  %s4 = inlined_call_operand.vmem [shape: f32[1,32], index: 4, kind: input, shape index: {}]
  %s5 = inlined_call_operand.hbm [shape: f32[16,32], index: 5, kind: output, shape index: {}]
  %s6 = sld [smem:[#allocation0]]
  $region65: #{tpu_custom_call.1} parent=0
    _
  %s8 = ssub.s32 1, %s6
  %s9 = scalar_select 0, %s8, %s6
  $region1: #{tpu_custom_call.1} parent=0
    #allocation4 [shape = 'u8[8192]{0}', space=vmem, size = 0x2000, scoped, tag = 'input window, operand 0']
    #allocation5 [shape = 's32[2]{0}', space=sflag, size = 0x8, scoped, tag = 'scoped memory for tpu_custom_call.1']
    #allocation6 [shape = 's32[2]{0}', space=sflag, size = 0x8, scoped, tag = 'scoped memory for tpu_custom_call.1']
    #allocation7 [shape = 'u8[8192]{0}', space=vmem, size = 0x2000, scoped, tag = 'input window, operand 1, single buffered']
    #allocation8 [shape = 's32[1]{0}', space=sflag, size = 0x4, scoped, tag = 'scoped memory for tpu_custom_call.1']
    #allocation9 [shape = 'u8[8192]{0}', space=vmem, size = 0x2000, scoped, tag = 'input window, operand 3, single buffered']
    #allocation10 [shape = 'u8[8192]{0}', space=vmem, size = 0x2000, scoped, tag = 'output window, operand 0']
    %10 = vsyncpa [#allocation5], 0
    %s11 = scalar_lea.sflag [#allocation5], 1
    %12 = vsyncpa %s11, 0
    %13 = vsyncpa [#allocation8], 0
    %14 = vsyncpa [#allocation6], 0
    %s15 = scalar_lea.sflag [#allocation6], 1
    %16 = vsyncpa %s15, 0
    loop: start=0, step=1, limit=4
    $region2: #{tpu_custom_call.1} parent=1 // loop_pre_header
      _
    $region3: #{tpu_custom_call.1} parent=1 // loop_header
      %s18 = sphi 0, %s22
      %p19 = scmp.ge.s32.totalorder %s18, 4
      %s28 = sphi 0, %s30
      %s31 = sphi 0, %s28
      %s32 = sphi 0, %s31
      %s48 = sphi 0, %s32
      %s52 = sphi 0, %s52
      %s54 = sphi 0, %s52
      %s55 = sphi 0, %s54
      %s69 = sphi 0, %s55
      %s73 = sphi 0, %s73
      %s75 = sphi 0, %s73
      %s76 = sphi 0, %s75
      %s90 = sphi 0, %s76
      %s94 = sphi 0, %s94
      %s96 = sphi 0, %s94
      %s97 = sphi 0, %s96
      %s111 = sphi 0, %s97
      %s115 = sphi 0, %s115
      %s117 = sphi 0, %s115
      %s118 = sphi 0, %s117
      %s132 = sphi 0, %s118
      %s138 = sphi 0, %s140
      %s141 = sphi 0, %s138
      %s142 = sphi 0, %s141
      %s158 = sphi 0, %s142
    $region4: #{tpu_custom_call.1} parent=1 // loop_header_branch
      %21 = sbr.rel (%p19) target = $region8
    $region5: #{tpu_custom_call.1} parent=1 // loop_body
      %s23 = ssub.s32 %s18, 1
      %s24 = ssub.s32 %s18, 2
      %s25 = sadd.s32 %s18, 1
      %s26 = ssub.s32 %s18, %s25
      %p27 = scmp.eq.s32.totalorder %s26, 0
      %s29 = sadd.s32 %s28, 1
      %s30 = scalar_select %p27, %s28, %s29
      %p33 = pneg %p27
      %p34 = scmp.eq.s32.totalorder %s18, 1
      %p35 = por %p33, %p34
      %p36 = scmp.ne.s32.totalorder %s28, %s31
      %p37 = scmp.eq.s32.totalorder %s18, 0
      %p38 = por %p36, %p37
      %p39 = scmp.ne.s32.totalorder %s28, %s31
      %p40 = scmp.eq.s32.totalorder %s23, 1
      %p41 = por %p39, %p40
      %p42 = scmp.ne.s32.totalorder %s31, %s32
      %p43 = scmp.eq.s32.totalorder %s23, 0
      %p44 = por %p42, %p43
      %p45 = scmp.ne.s32.totalorder %s31, %s32
      %p46 = scmp.eq.s32.totalorder %s24, 1
      %p47 = por %p45, %p46
      %p49 = scmp.ne.s32.totalorder %s32, %s48
      %p50 = scmp.eq.s32.totalorder %s24, 0
      %p51 = por %p49, %p50
      %s53 = sadd.s32 %s52, 1
      %p56 = scmp.eq.s32.totalorder %s18, 1
      %p57 = scmp.ne.s32.totalorder %s52, %s54
      %p58 = scmp.eq.s32.totalorder %s18, 0
      %p59 = por %p57, %p58
      %p60 = scmp.ne.s32.totalorder %s52, %s54
      %p61 = scmp.eq.s32.totalorder %s23, 1
      %p62 = por %p60, %p61
      %p63 = scmp.ne.s32.totalorder %s54, %s55
      %p64 = scmp.eq.s32.totalorder %s23, 0
      %p65 = por %p63, %p64
      %p66 = scmp.ne.s32.totalorder %s54, %s55
      %p67 = scmp.eq.s32.totalorder %s24, 1
      %p68 = por %p66, %p67
      %p70 = scmp.ne.s32.totalorder %s55, %s69
      %p71 = scmp.eq.s32.totalorder %s24, 0
      %p72 = por %p70, %p71
      %s74 = sadd.s32 %s73, 1
      %p77 = scmp.eq.s32.totalorder %s18, 1
      %p78 = scmp.ne.s32.totalorder %s73, %s75
      %p79 = scmp.eq.s32.totalorder %s18, 0
      %p80 = por %p78, %p79
      %p81 = scmp.ne.s32.totalorder %s73, %s75
      %p82 = scmp.eq.s32.totalorder %s23, 1
      %p83 = por %p81, %p82
      %p84 = scmp.ne.s32.totalorder %s75, %s76
      %p85 = scmp.eq.s32.totalorder %s23, 0
      %p86 = por %p84, %p85
      %p87 = scmp.ne.s32.totalorder %s75, %s76
      %p88 = scmp.eq.s32.totalorder %s24, 1
      %p89 = por %p87, %p88
      %p91 = scmp.ne.s32.totalorder %s76, %s90
      %p92 = scmp.eq.s32.totalorder %s24, 0
      %p93 = por %p91, %p92
      %s95 = sadd.s32 %s94, 1
      %p98 = scmp.eq.s32.totalorder %s18, 1
      %p99 = scmp.ne.s32.totalorder %s94, %s96
      %p100 = scmp.eq.s32.totalorder %s18, 0
      %p101 = por %p99, %p100
      %p102 = scmp.ne.s32.totalorder %s94, %s96
      %p103 = scmp.eq.s32.totalorder %s23, 1
      %p104 = por %p102, %p103
      %p105 = scmp.ne.s32.totalorder %s96, %s97
      %p106 = scmp.eq.s32.totalorder %s23, 0
      %p107 = por %p105, %p106
      %p108 = scmp.ne.s32.totalorder %s96, %s97
      %p109 = scmp.eq.s32.totalorder %s24, 1
      %p110 = por %p108, %p109
      %p112 = scmp.ne.s32.totalorder %s97, %s111
      %p113 = scmp.eq.s32.totalorder %s24, 0
      %p114 = por %p112, %p113
      %s116 = sadd.s32 %s115, 1
      %p119 = scmp.eq.s32.totalorder %s18, 1
      %p120 = scmp.ne.s32.totalorder %s115, %s117
      %p121 = scmp.eq.s32.totalorder %s18, 0
      %p122 = por %p120, %p121
      %p123 = scmp.ne.s32.totalorder %s115, %s117
      %p124 = scmp.eq.s32.totalorder %s23, 1
      %p125 = por %p123, %p124
      %p126 = scmp.ne.s32.totalorder %s117, %s118
      %p127 = scmp.eq.s32.totalorder %s23, 0
      %p128 = por %p126, %p127
      %p129 = scmp.ne.s32.totalorder %s117, %s118
      %p130 = scmp.eq.s32.totalorder %s24, 1
      %p131 = por %p129, %p130
      %p133 = scmp.ne.s32.totalorder %s118, %s132
      %p134 = scmp.eq.s32.totalorder %s24, 0
      %p135 = por %p133, %p134
      %s136 = ssub.s32 %s18, %s25
      %p137 = scmp.eq.s32.totalorder %s136, 0
      %s139 = sadd.s32 %s138, 1
      %s140 = scalar_select %p137, %s138, %s139
      %p143 = pneg %p137
      %p144 = scmp.eq.s32.totalorder %s18, 1
      %p145 = por %p143, %p144
      %p146 = scmp.ne.s32.totalorder %s138, %s141
      %p147 = scmp.eq.s32.totalorder %s18, 0
      %p148 = por %p146, %p147
      %p149 = scmp.ne.s32.totalorder %s138, %s141
      %p150 = scmp.eq.s32.totalorder %s23, 1
      %p151 = por %p149, %p150
      %p152 = scmp.ne.s32.totalorder %s141, %s142
      %p153 = scmp.eq.s32.totalorder %s23, 0
      %p154 = por %p152, %p153
      %p155 = scmp.ne.s32.totalorder %s141, %s142
      %p156 = scmp.eq.s32.totalorder %s24, 1
      %p157 = por %p155, %p156
      %p159 = scmp.ne.s32.totalorder %s142, %s158
      %p160 = scmp.eq.s32.totalorder %s24, 0
      %p161 = por %p159, %p160
      %p162 = scmp.le.s32.totalorder 1, %s18
      %p163 = scmp.lt.s32.totalorder %s18, 3
      %p164 = pnand %p162, %p163
      %p165 = pneg %p164
      // Predicated region
      $region9: #{tpu_custom_call.1} parent=5 // pred_check
        _
      $region10: #{tpu_custom_call.1} parent=5 // pred_check_branch
        %167 = sbr.rel (%p164) target = $region12
      $region11: #{tpu_custom_call.1} parent=5 // pred_region
        %s168 = ssub.s32 %s18, 1
        // Predicated region
        $region13: #{tpu_custom_call.1} parent=11 // pred_check
          %p169 = pneg %p65
        $region14: #{tpu_custom_call.1} parent=11 // pred_check_branch
          %171 = sbr.rel (%p169) target = $region16
        $region15: #{tpu_custom_call.1} parent=11 // pred_region
          %s173 = ssub.s32 256, 256
          %174 = vsyncadd [#allocation8], %s173
          %s175 = sshll.u32 [#allocation7], 4
          %s176 = int_to_ptr.vmem [resolvable:$true] %s175
          %181 = dma.hbm_to_vmem [thread:$0]  %s1, 256, %s176, [#allocation8], 64, 64, 4
        $region16: #{tpu_custom_call.1} parent=11 // pred_fallthru
          _
        // Predicated region
        $region17: #{tpu_custom_call.1} parent=11 // pred_check
          %p182 = pneg %p86
        $region18: #{tpu_custom_call.1} parent=11 // pred_check_branch
          %184 = sbr.rel (%p182) target = $region20
        $region19: #{tpu_custom_call.1} parent=11 // pred_region
          _
        $region20: #{tpu_custom_call.1} parent=11 // pred_fallthru
          _
        // Predicated region
        $region21: #{tpu_custom_call.1} parent=11 // pred_check
          %p185 = pneg %p107
        $region22: #{tpu_custom_call.1} parent=11 // pred_check_branch
          %187 = sbr.rel (%p185) target = $region24
        $region23: #{tpu_custom_call.1} parent=11 // pred_region
          %s189 = ssub.s32 256, 256
          %190 = vsyncadd [#allocation8], %s189
          %s191 = sshll.u32 [#allocation9], 4
          %s192 = int_to_ptr.vmem [resolvable:$true] %s191
          %197 = dma.hbm_to_vmem [thread:$0]  %s3, 256, %s192, [#allocation8], 64, 64, 4
        $region24: #{tpu_custom_call.1} parent=11 // pred_fallthru
          _
        // Predicated region
        $region25: #{tpu_custom_call.1} parent=11 // pred_check
          %p198 = pneg %p128
        $region26: #{tpu_custom_call.1} parent=11 // pred_check_branch
          %200 = sbr.rel (%p198) target = $region28
        $region27: #{tpu_custom_call.1} parent=11 // pred_region
          _
        $region28: #{tpu_custom_call.1} parent=11 // pred_fallthru
          _
      $region12: #{tpu_custom_call.1} parent=5 // pred_fallthru
        _
      %p201 = scmp.lt.s32.totalorder %s18, 2
      // Predicated region
      $region29: #{tpu_custom_call.1} parent=5 // pred_check
        %p202 = pneg %p201
      $region30: #{tpu_custom_call.1} parent=5 // pred_check_branch
        %204 = sbr.rel (%p202) target = $region32
      $region31: #{tpu_custom_call.1} parent=5 // pred_region
        // Predicated region
        $region33: #{tpu_custom_call.1} parent=31 // pred_check
          %p205 = pneg %p38
        $region34: #{tpu_custom_call.1} parent=31 // pred_check_branch
          %207 = sbr.rel (%p205) target = $region36
        $region35: #{tpu_custom_call.1} parent=31 // pred_region
          %s208 = sand.u32 %s28, 1
          %s209 = scalar_lea.sflag [#allocation5], %s208
          %s210 = sand.u32 %s28, 1
          %s211 = smul.addr %s210, 8
          %s212 = scalar_lea.vmem [#allocation4], %s211
          %s214 = ssub.s32 128, 128
          %215 = vsyncadd %s209, %s214
          %s216 = smul.addr %s18, 128
          %s217 = scalar_lea.hbm %s0, %s216
          %s219 = sshll.u32 %s212, 4
          %s220 = int_to_ptr.vmem [resolvable:$true] %s219
          %222 = dma.hbm_to_vmem [thread:$0]  %s217, 128, %s220, %s209
        $region36: #{tpu_custom_call.1} parent=31 // pred_fallthru
          _
      $region32: #{tpu_custom_call.1} parent=5 // pred_fallthru
        _
      %p223 = scmp.le.s32.totalorder 1, %s18
      %p224 = scmp.lt.s32.totalorder %s18, 3
      %p225 = pnand %p223, %p224
      %p226 = pneg %p225
      // Predicated region
      $region37: #{tpu_custom_call.1} parent=5 // pred_check
        _
      $region38: #{tpu_custom_call.1} parent=5 // pred_check_branch
        %228 = sbr.rel (%p225) target = $region40
      $region39: #{tpu_custom_call.1} parent=5 // pred_region
        %s229 = ssub.s32 %s18, 1
        %s230 = sand.u32 %s31, 1
        %s231 = scalar_lea.sflag [#allocation5], %s230
        %s232 = sand.u32 %s31, 1
        %s233 = smul.addr %s232, 8
        %s234 = scalar_lea.vmem [#allocation4], %s233
        // Predicated region
        $region41: #{tpu_custom_call.1} parent=39 // pred_check
          %p235 = pneg %p44
        $region42: #{tpu_custom_call.1} parent=39 // pred_check_branch
          %237 = sbr.rel (%p235) target = $region44
        $region43: #{tpu_custom_call.1} parent=39 // pred_region
          %238 = dma.done %s231, 128
        $region44: #{tpu_custom_call.1} parent=39 // pred_fallthru
          _
        // Predicated region
        $region45: #{tpu_custom_call.1} parent=39 // pred_check
          %p239 = pneg %p65
        $region46: #{tpu_custom_call.1} parent=39 // pred_check_branch
          %241 = sbr.rel (%p239) target = $region48
        $region47: #{tpu_custom_call.1} parent=39 // pred_region
          %242 = dma.done [#allocation8], 256
        $region48: #{tpu_custom_call.1} parent=39 // pred_fallthru
          _
        // Predicated region
        $region49: #{tpu_custom_call.1} parent=39 // pred_check
          %p243 = pneg %p107
        $region50: #{tpu_custom_call.1} parent=39 // pred_check_branch
          %245 = sbr.rel (%p243) target = $region52
        $region51: #{tpu_custom_call.1} parent=39 // pred_region
          %246 = dma.done [#allocation8], 256
        $region52: #{tpu_custom_call.1} parent=39 // pred_fallthru
          _
        %s247 = sand.u32 %s31, 1
        %s248 = scalar_lea.sflag [#allocation5], %s247
        %s249 = sand.u32 %s31, 1
        %s250 = smul.addr %s249, 8
        %s251 = scalar_lea.vmem [#allocation4], %s250
        %p252 = pneg %p44
        %p253 = pneg %p41
        %p254 = pneg %p65
        %p255 = pneg %p62
        %p256 = pneg %p86
        %p257 = pneg %p83
        %p258 = pneg %p107
        %p259 = pneg %p104
        %p260 = pneg %p128
        %p261 = pneg %p125
        %p262 = pneg %p154
        %p263 = pneg %p151
        %s264 = sand.u32 %s141, 1
        %s265 = scalar_lea.sflag [#allocation6], %s264
        %s266 = sand.u32 %s141, 1
        %s267 = smul.addr %s266, 8
        %s268 = scalar_lea.vmem [#allocation10], %s267
        %v270 = vld [vmem:[%s234] sm:$0xff]
        %v271 = vpack.c.bf16 %v270, %v270
        %v272 = vld [vmem:[#allocation7] sm:$0xf]
        %v273 = vld [vmem:[#allocation7 + $0x4] sm:$0xf]
        %v274 = vld [vmem:[#allocation7 + $0x8] sm:$0xf]
        %v275 = vld [vmem:[#allocation7 + $0xc] sm:$0xf]
        %v276 = vld [vmem:[%s2] sm:$0x1]
        %v278 = vlaneseq
        %v279 = vshrl.u32 %v278, 7
        %v280 = vsub.s32 0, %v279
        %v281 = vrot.slane %v276, %v280
        %v287 = vunpack.c.l.b16 %v272
        %v288 = vunpack.c.l.b16 %v273
        %v289 = vunpack.c.l.b16 %v274
        %v290 = vunpack.c.l.b16 %v275
        %v291 = vpack.c.b16 %v288, %v287
        %v292 = vpack.c.b16 %v290, %v289
        %vm295 = vcmask 261120
        %v297 = vsel %vm295, %v271, 0
        %299 = vmatprep.subr.bf16.mxu0 0
        %300 = vmatpush1.bf16.msra.mxu0 %v291
        %301 = vmatprep.subr.bf16.mxu0 0
        %302 = vmatpush1.bf16.msra.mxu0 %v292
        %303 = vmatprep.subr.bf16.mxu0 0
        %304 = vmatpush1.bf16.msra.mxu0 0
        %305 = vmatprep.subr.bf16.mxu0 0
        %306 = vmatpush1.bf16.msra.mxu0 0
        %307 = vmatprep.subr.bf16.mxu0 0
        %308 = vmatpush1.bf16.msra.mxu0 0
        %309 = vmatprep.subr.bf16.mxu0 0
        %310 = vmatpush1.bf16.msra.mxu0 0
        %311 = vmatprep.subr.bf16.mxu0 0
        %312 = vmatpush1.bf16.msra.mxu0 0
        %313 = vmatprep.subr.bf16.mxu0 0
        %314 = vmatpush1.bf16.msra.mxu0 0
        %315 = vmatprep.subr.bf16.mxu0 0
        %316 = vmatpush1.bf16.msra.mxu0 0
        %317 = vmatprep.subr.bf16.mxu0 0
        %318 = vmatpush1.bf16.msra.mxu0 0
        %319 = vmatprep.subr.bf16.mxu0 0
        %320 = vmatpush1.bf16.msra.mxu0 0
        %321 = vmatprep.subr.bf16.mxu0 0
        %322 = vmatpush1.bf16.msra.mxu0 0
        %323 = vmatprep.subr.bf16.mxu0 0
        %324 = vmatpush1.bf16.msra.mxu0 0
        %325 = vmatprep.subr.bf16.mxu0 0
        %326 = vmatpush1.bf16.msra.mxu0 0
        %327 = vmatprep.subr.bf16.mxu0 0
        %328 = vmatpush1.bf16.msra.mxu0 0
        %329 = vmatprep.subr.bf16.mxu0 0
        %330 = vmatpush1.bf16.msra.mxu0 0
        %331 = vmatprep.mubr.bf16.mxu0 0
        %332 = vmatmul.mubr.bf16.gmra.mrb[0].mxu0 %v297
        %v333 = vpop.f32.mrb[0].mxu0
        %v334 = vadd.f32 %v281, %v333
        %v335 = vpop.f32.mrb[0].mxu0
        %v336 = vpop.f32.mrb[0].mxu0
        %v337 = vpop.f32.mrb[0].mxu0
        %338 = vdwg.mxu0
        %v339 = vpack.c.bf16 %v334, %v334
        %vm340 = vcmask 781312
        %341 = vst.msk [vmem:[#allocation2] sm:$0xf] %vm340, %v339
        %v342 = vld [vmem:[#allocation2] sm:$0xf]
        %v344 = vunpack.c.l.b16 %v342
        %v345 = vpack.c.b16 %v344, %v344
        %346 = vrot.lane.b32.xlu0 %v345, 96
        %v347 = vpop.permute.xlu0 %346
        %vm348 = vcmask 64512
        %v350 = vsel %vm348, %v342, 0
        %v353 = vsel %vm348, %v347, 0
        %355 = vmatprep.subr.bf16.mxu0 0
        %356 = vmatpush1.bf16.xpose.msra.mxu0 %v353
        %357 = vmatprep.subr.bf16.mxu0 0
        %358 = vmatpush1.bf16.xpose.msra.mxu0 0
        %359 = vmatprep.subr.bf16.mxu0 0
        %360 = vmatpush1.bf16.xpose.msra.mxu0 0
        %361 = vmatprep.subr.bf16.mxu0 0
        %362 = vmatpush1.bf16.xpose.msra.mxu0 0
        %363 = vmatprep.subr.bf16.mxu0 0
        %364 = vmatpush1.bf16.xpose.msra.mxu0 0
        %365 = vmatprep.subr.bf16.mxu0 0
        %366 = vmatpush1.bf16.xpose.msra.mxu0 0
        %367 = vmatprep.subr.bf16.mxu0 0
        %368 = vmatpush1.bf16.xpose.msra.mxu0 0
        %369 = vmatprep.subr.bf16.mxu0 0
        %370 = vmatpush1.bf16.xpose.msra.mxu0 0
        %371 = vmatprep.subr.bf16.mxu0 0
        %372 = vmatpush1.bf16.xpose.msra.mxu0 0
        %373 = vmatprep.subr.bf16.mxu0 0
        %374 = vmatpush1.bf16.xpose.msra.mxu0 0
        %375 = vmatprep.subr.bf16.mxu0 0
        %376 = vmatpush1.bf16.xpose.msra.mxu0 0
        %377 = vmatprep.subr.bf16.mxu0 0
        %378 = vmatpush1.bf16.xpose.msra.mxu0 0
        %379 = vmatprep.subr.bf16.mxu0 0
        %380 = vmatpush1.bf16.xpose.msra.mxu0 0
        %381 = vmatprep.subr.bf16.mxu0 0
        %382 = vmatpush1.bf16.xpose.msra.mxu0 0
        %383 = vmatprep.subr.bf16.mxu0 0
        %384 = vmatpush1.bf16.xpose.msra.mxu0 0
        %385 = vmatprep.subr.bf16.mxu0 0
        %386 = vmatpush1.bf16.xpose.msra.mxu0 0
        %387 = vmatprep.mubr.bf16.mxu0 0
        %388 = vmatmul.mubr.bf16.gmra.mrb[0].mxu0 %v350
        %v389 = vpop.f32.mrb[0].mxu0
        %v390 = vadd.f32 0.0, %v389
        %v391 = vpop.f32.mrb[0].mxu0
        %v392 = vpop.f32.mrb[0].mxu0
        %v393 = vpop.f32.mrb[0].mxu0
        %394 = vdwg.mxu0
        %v395 = vsel %vm348, %v390, -inf
        %396 = vmax.xlane.f32.xlu0 %v395
        %v397 = vpop.xlane.xlu0 %396
        %v398 = vsub.f32 %v390, %v397
        %v399 = vmul.f32 %v398, 1.442695
        %v400 = vpow.pop %v399
        %v401 = vsel %vm348, %v400, 0.0
        %402 = vadd.xlane.f32.xlu0 %v401
        %v403 = vpop.xlane.xlu0 %402
        %v404 = vrcp.pop %v403
        %v405 = vmul.f32 %v400, %v404
        %v406 = vpack.c.bf16 %v405, %v405
        %407 = vrot.lane.b32.xlu0 %v345, 64
        %v408 = vpop.permute.xlu0 %407
        %v410 = vsel %vm348, %v406, 0
        %vm412 = vcmask 1043456
        %v414 = vsel %vm412, %v408, 0
        %416 = vmatprep.subr.bf16.mxu0 0
        %417 = vmatpush1.bf16.msra.mxu0 %v414
        %418 = vmatprep.subr.bf16.mxu0 0
        %419 = vmatpush1.bf16.msra.mxu0 0
        %420 = vmatprep.subr.bf16.mxu0 0
        %421 = vmatpush1.bf16.msra.mxu0 0
        %422 = vmatprep.subr.bf16.mxu0 0
        %423 = vmatpush1.bf16.msra.mxu0 0
        %424 = vmatprep.subr.bf16.mxu0 0
        %425 = vmatpush1.bf16.msra.mxu0 0
        %426 = vmatprep.subr.bf16.mxu0 0
        %427 = vmatpush1.bf16.msra.mxu0 0
        %428 = vmatprep.subr.bf16.mxu0 0
        %429 = vmatpush1.bf16.msra.mxu0 0
        %430 = vmatprep.subr.bf16.mxu0 0
        %431 = vmatpush1.bf16.msra.mxu0 0
        %432 = vmatprep.subr.bf16.mxu0 0
        %433 = vmatpush1.bf16.msra.mxu0 0
        %434 = vmatprep.subr.bf16.mxu0 0
        %435 = vmatpush1.bf16.msra.mxu0 0
        %436 = vmatprep.subr.bf16.mxu0 0
        %437 = vmatpush1.bf16.msra.mxu0 0
        %438 = vmatprep.subr.bf16.mxu0 0
        %439 = vmatpush1.bf16.msra.mxu0 0
        %440 = vmatprep.subr.bf16.mxu0 0
        %441 = vmatpush1.bf16.msra.mxu0 0
        %442 = vmatprep.subr.bf16.mxu0 0
        %443 = vmatpush1.bf16.msra.mxu0 0
        %444 = vmatprep.subr.bf16.mxu0 0
        %445 = vmatpush1.bf16.msra.mxu0 0
        %446 = vmatprep.subr.bf16.mxu0 0
        %447 = vmatpush1.bf16.msra.mxu0 0
        %448 = vmatprep.mubr.bf16.mxu0 0
        %449 = vmatmul.mubr.bf16.gmra.mrb[0].mxu0 %v410
        %v450 = vpop.f32.mrb[0].mxu0
        %v451 = vadd.f32 0.0, %v450
        %v452 = vpop.f32.mrb[0].mxu0
        %v453 = vpop.f32.mrb[0].mxu0
        %v454 = vpop.f32.mrb[0].mxu0
        %455 = vdwg.mxu0
        %456 = vst.msk [vmem:[#allocation3] sm:$0xff] %vm348, %v451
        %v457 = vld [vmem:[#allocation2] sm:$0xf]
        %v459 = vunpack.c.l.b16 %v457
        %v460 = vpack.c.b16 %v459, %v459
        %461 = vrot.lane.b32.xlu0 %v460, 120
        %v462 = vpop.permute.xlu0 %461
        %463 = vrot.lane.b32.xlu0 %v460, 88
        %v464 = vpop.permute.xlu0 %463
        %v466 = vsel %vm348, %v462, 0
        %v469 = vsel %vm348, %v464, 0
        %471 = vmatprep.subr.bf16.mxu0 0
        %472 = vmatpush1.bf16.xpose.msra.mxu0 %v469
        %473 = vmatprep.subr.bf16.mxu0 0
        %474 = vmatpush1.bf16.xpose.msra.mxu0 0
        %475 = vmatprep.subr.bf16.mxu0 0
        %476 = vmatpush1.bf16.xpose.msra.mxu0 0
        %477 = vmatprep.subr.bf16.mxu0 0
        %478 = vmatpush1.bf16.xpose.msra.mxu0 0
        %479 = vmatprep.subr.bf16.mxu0 0
        %480 = vmatpush1.bf16.xpose.msra.mxu0 0
        %481 = vmatprep.subr.bf16.mxu0 0
        %482 = vmatpush1.bf16.xpose.msra.mxu0 0
        %483 = vmatprep.subr.bf16.mxu0 0
        %484 = vmatpush1.bf16.xpose.msra.mxu0 0
        %485 = vmatprep.subr.bf16.mxu0 0
        %486 = vmatpush1.bf16.xpose.msra.mxu0 0
        %487 = vmatprep.subr.bf16.mxu0 0
        %488 = vmatpush1.bf16.xpose.msra.mxu0 0
        %489 = vmatprep.subr.bf16.mxu0 0
        %490 = vmatpush1.bf16.xpose.msra.mxu0 0
        %491 = vmatprep.subr.bf16.mxu0 0
        %492 = vmatpush1.bf16.xpose.msra.mxu0 0
        %493 = vmatprep.subr.bf16.mxu0 0
        %494 = vmatpush1.bf16.xpose.msra.mxu0 0
        %495 = vmatprep.subr.bf16.mxu0 0
        %496 = vmatpush1.bf16.xpose.msra.mxu0 0
        %497 = vmatprep.subr.bf16.mxu0 0
        %498 = vmatpush1.bf16.xpose.msra.mxu0 0
        %499 = vmatprep.subr.bf16.mxu0 0
        %500 = vmatpush1.bf16.xpose.msra.mxu0 0
        %501 = vmatprep.subr.bf16.mxu0 0
        %502 = vmatpush1.bf16.xpose.msra.mxu0 0
        %503 = vmatprep.mubr.bf16.mxu0 0
        %504 = vmatmul.mubr.bf16.gmra.mrb[0].mxu0 %v466
        %v505 = vpop.f32.mrb[0].mxu0
        %v506 = vadd.f32 0.0, %v505
        %v507 = vpop.f32.mrb[0].mxu0
        %v508 = vpop.f32.mrb[0].mxu0
        %v509 = vpop.f32.mrb[0].mxu0
        %510 = vdwg.mxu0
        %v511 = vsel %vm348, %v506, -inf
        %512 = vmax.xlane.f32.xlu0 %v511
        %v513 = vpop.xlane.xlu0 %512
        %v514 = vsub.f32 %v506, %v513
        %v515 = vmul.f32 %v514, 1.442695
        %v516 = vpow.pop %v515
        %v517 = vsel %vm348, %v516, 0.0
        %518 = vadd.xlane.f32.xlu0 %v517
        %v519 = vpop.xlane.xlu0 %518
        %v520 = vrcp.pop %v519
        %v521 = vmul.f32 %v516, %v520
        %v522 = vpack.c.bf16 %v521, %v521
        %523 = vrot.lane.b32.xlu0 %v460, 56
        %v524 = vpop.permute.xlu0 %523
        %v526 = vsel %vm348, %v522, 0
        %v529 = vsel %vm412, %v524, 0
        %531 = vmatprep.subr.bf16.mxu0 0
        %532 = vmatpush1.bf16.msra.mxu0 %v529
        %533 = vmatprep.subr.bf16.mxu0 0
        %534 = vmatpush1.bf16.msra.mxu0 0
        %535 = vmatprep.subr.bf16.mxu0 0
        %536 = vmatpush1.bf16.msra.mxu0 0
        %537 = vmatprep.subr.bf16.mxu0 0
        %538 = vmatpush1.bf16.msra.mxu0 0
        %539 = vmatprep.subr.bf16.mxu0 0
        %540 = vmatpush1.bf16.msra.mxu0 0
        %541 = vmatprep.subr.bf16.mxu0 0
        %542 = vmatpush1.bf16.msra.mxu0 0
        %543 = vmatprep.subr.bf16.mxu0 0
        %544 = vmatpush1.bf16.msra.mxu0 0
        %545 = vmatprep.subr.bf16.mxu0 0
        %546 = vmatpush1.bf16.msra.mxu0 0
        %547 = vmatprep.subr.bf16.mxu0 0
        %548 = vmatpush1.bf16.msra.mxu0 0
        %549 = vmatprep.subr.bf16.mxu0 0
        %550 = vmatpush1.bf16.msra.mxu0 0
        %551 = vmatprep.subr.bf16.mxu0 0
        %552 = vmatpush1.bf16.msra.mxu0 0
        %553 = vmatprep.subr.bf16.mxu0 0
        %554 = vmatpush1.bf16.msra.mxu0 0
        %555 = vmatprep.subr.bf16.mxu0 0
        %556 = vmatpush1.bf16.msra.mxu0 0
        %557 = vmatprep.subr.bf16.mxu0 0
        %558 = vmatpush1.bf16.msra.mxu0 0
        %559 = vmatprep.subr.bf16.mxu0 0
        %560 = vmatpush1.bf16.msra.mxu0 0
        %561 = vmatprep.subr.bf16.mxu0 0
        %562 = vmatpush1.bf16.msra.mxu0 0
        %563 = vmatprep.mubr.bf16.mxu0 0
        %564 = vmatmul.mubr.bf16.gmra.mrb[0].mxu0 %v526
        %v565 = vpop.f32.mrb[0].mxu0
        %v566 = vadd.f32 0.0, %v565
        %v567 = vpop.f32.mrb[0].mxu0
        %v568 = vpop.f32.mrb[0].mxu0
        %v569 = vpop.f32.mrb[0].mxu0
        %570 = vdwg.mxu0
        %572 = vrot.lane.b32.xlu0 %v566, 8
        %v573 = vpop.permute.xlu0 %572
        %vm575 = vcmask 130112
        %576 = vst.msk [vmem:[#allocation3] sm:$0xff] %vm575, %v573
        %v577 = vld [vmem:[#allocation2] sm:$0xf]
        %v579 = vunpack.c.l.b16 %v577
        %v580 = vpack.c.b16 %v579, %v579
        %581 = vrot.lane.b32.xlu0 %v580, 112
        %v582 = vpop.permute.xlu0 %581
        %583 = vrot.lane.b32.xlu0 %v580, 80
        %v584 = vpop.permute.xlu0 %583
        %v586 = vsel %vm348, %v582, 0
        %v589 = vsel %vm348, %v584, 0
        %591 = vmatprep.subr.bf16.mxu0 0
        %592 = vmatpush1.bf16.xpose.msra.mxu0 %v589
        %593 = vmatprep.subr.bf16.mxu0 0
        %594 = vmatpush1.bf16.xpose.msra.mxu0 0
        %595 = vmatprep.subr.bf16.mxu0 0
        %596 = vmatpush1.bf16.xpose.msra.mxu0 0
        %597 = vmatprep.subr.bf16.mxu0 0
        %598 = vmatpush1.bf16.xpose.msra.mxu0 0
        %599 = vmatprep.subr.bf16.mxu0 0
        %600 = vmatpush1.bf16.xpose.msra.mxu0 0
        %601 = vmatprep.subr.bf16.mxu0 0
        %602 = vmatpush1.bf16.xpose.msra.mxu0 0
        %603 = vmatprep.subr.bf16.mxu0 0
        %604 = vmatpush1.bf16.xpose.msra.mxu0 0
        %605 = vmatprep.subr.bf16.mxu0 0
        %606 = vmatpush1.bf16.xpose.msra.mxu0 0
        %607 = vmatprep.subr.bf16.mxu0 0
        %608 = vmatpush1.bf16.xpose.msra.mxu0 0
        %609 = vmatprep.subr.bf16.mxu0 0
        %610 = vmatpush1.bf16.xpose.msra.mxu0 0
        %611 = vmatprep.subr.bf16.mxu0 0
        %612 = vmatpush1.bf16.xpose.msra.mxu0 0
        %613 = vmatprep.subr.bf16.mxu0 0
        %614 = vmatpush1.bf16.xpose.msra.mxu0 0
        %615 = vmatprep.subr.bf16.mxu0 0
        %616 = vmatpush1.bf16.xpose.msra.mxu0 0
        %617 = vmatprep.subr.bf16.mxu0 0
        %618 = vmatpush1.bf16.xpose.msra.mxu0 0
        %619 = vmatprep.subr.bf16.mxu0 0
        %620 = vmatpush1.bf16.xpose.msra.mxu0 0
        %621 = vmatprep.subr.bf16.mxu0 0
        %622 = vmatpush1.bf16.xpose.msra.mxu0 0
        %623 = vmatprep.mubr.bf16.mxu0 0
        %624 = vmatmul.mubr.bf16.gmra.mrb[0].mxu0 %v586
        %v625 = vpop.f32.mrb[0].mxu0
        %v626 = vadd.f32 0.0, %v625
        %v627 = vpop.f32.mrb[0].mxu0
        %v628 = vpop.f32.mrb[0].mxu0
        %v629 = vpop.f32.mrb[0].mxu0
        %630 = vdwg.mxu0
        %v631 = vsel %vm348, %v626, -inf
        %632 = vmax.xlane.f32.xlu0 %v631
        %v633 = vpop.xlane.xlu0 %632
        %v634 = vsub.f32 %v626, %v633
        %v635 = vmul.f32 %v634, 1.442695
        %v636 = vpow.pop %v635
        %v637 = vsel %vm348, %v636, 0.0
        %638 = vadd.xlane.f32.xlu0 %v637
        %v639 = vpop.xlane.xlu0 %638
        %v640 = vrcp.pop %v639
        %v641 = vmul.f32 %v636, %v640
        %v642 = vpack.c.bf16 %v641, %v641
        %643 = vrot.lane.b32.xlu0 %v580, 48
        %v644 = vpop.permute.xlu0 %643
        %v646 = vsel %vm348, %v642, 0
        %v649 = vsel %vm412, %v644, 0
        %651 = vmatprep.subr.bf16.mxu0 0
        %652 = vmatpush1.bf16.msra.mxu0 %v649
        %653 = vmatprep.subr.bf16.mxu0 0
        %654 = vmatpush1.bf16.msra.mxu0 0
        %655 = vmatprep.subr.bf16.mxu0 0
        %656 = vmatpush1.bf16.msra.mxu0 0
        %657 = vmatprep.subr.bf16.mxu0 0
        %658 = vmatpush1.bf16.msra.mxu0 0
        %659 = vmatprep.subr.bf16.mxu0 0
        %660 = vmatpush1.bf16.msra.mxu0 0
        %661 = vmatprep.subr.bf16.mxu0 0
        %662 = vmatpush1.bf16.msra.mxu0 0
        %663 = vmatprep.subr.bf16.mxu0 0
        %664 = vmatpush1.bf16.msra.mxu0 0
        %665 = vmatprep.subr.bf16.mxu0 0
        %666 = vmatpush1.bf16.msra.mxu0 0
        %667 = vmatprep.subr.bf16.mxu0 0
        %668 = vmatpush1.bf16.msra.mxu0 0
        %669 = vmatprep.subr.bf16.mxu0 0
        %670 = vmatpush1.bf16.msra.mxu0 0
        %671 = vmatprep.subr.bf16.mxu0 0
        %672 = vmatpush1.bf16.msra.mxu0 0
        %673 = vmatprep.subr.bf16.mxu0 0
        %674 = vmatpush1.bf16.msra.mxu0 0
        %675 = vmatprep.subr.bf16.mxu0 0
        %676 = vmatpush1.bf16.msra.mxu0 0
        %677 = vmatprep.subr.bf16.mxu0 0
        %678 = vmatpush1.bf16.msra.mxu0 0
        %679 = vmatprep.subr.bf16.mxu0 0
        %680 = vmatpush1.bf16.msra.mxu0 0
        %681 = vmatprep.subr.bf16.mxu0 0
        %682 = vmatpush1.bf16.msra.mxu0 0
        %683 = vmatprep.mubr.bf16.mxu0 0
        %684 = vmatmul.mubr.bf16.gmra.mrb[0].mxu0 %v646
        %v685 = vpop.f32.mrb[0].mxu0
        %v686 = vadd.f32 0.0, %v685
        %v687 = vpop.f32.mrb[0].mxu0
        %v688 = vpop.f32.mrb[0].mxu0
        %v689 = vpop.f32.mrb[0].mxu0
        %690 = vdwg.mxu0
        %692 = vrot.lane.b32.xlu0 %v686, 16
        %v693 = vpop.permute.xlu0 %692
        %vm695 = vcmask 195712
        %696 = vst.msk [vmem:[#allocation3] sm:$0xff] %vm695, %v693
        %v697 = vld [vmem:[#allocation2] sm:$0xf]
        %v699 = vunpack.c.l.b16 %v697
        %v700 = vpack.c.b16 %v699, %v699
        %701 = vrot.lane.b32.xlu0 %v700, 104
        %v702 = vpop.permute.xlu0 %701
        %703 = vrot.lane.b32.xlu0 %v700, 72
        %v704 = vpop.permute.xlu0 %703
        %v706 = vsel %vm348, %v702, 0
        %v709 = vsel %vm348, %v704, 0
        %711 = vmatprep.subr.bf16.mxu0 0
        %712 = vmatpush1.bf16.xpose.msra.mxu0 %v709
        %713 = vmatprep.subr.bf16.mxu0 0
        %714 = vmatpush1.bf16.xpose.msra.mxu0 0
        %715 = vmatprep.subr.bf16.mxu0 0
        %716 = vmatpush1.bf16.xpose.msra.mxu0 0
        %717 = vmatprep.subr.bf16.mxu0 0
        %718 = vmatpush1.bf16.xpose.msra.mxu0 0
        %719 = vmatprep.subr.bf16.mxu0 0
        %720 = vmatpush1.bf16.xpose.msra.mxu0 0
        %721 = vmatprep.subr.bf16.mxu0 0
        %722 = vmatpush1.bf16.xpose.msra.mxu0 0
        %723 = vmatprep.subr.bf16.mxu0 0
        %724 = vmatpush1.bf16.xpose.msra.mxu0 0
        %725 = vmatprep.subr.bf16.mxu0 0
        %726 = vmatpush1.bf16.xpose.msra.mxu0 0
        %727 = vmatprep.subr.bf16.mxu0 0
        %728 = vmatpush1.bf16.xpose.msra.mxu0 0
        %729 = vmatprep.subr.bf16.mxu0 0
        %730 = vmatpush1.bf16.xpose.msra.mxu0 0
        %731 = vmatprep.subr.bf16.mxu0 0
        %732 = vmatpush1.bf16.xpose.msra.mxu0 0
        %733 = vmatprep.subr.bf16.mxu0 0
        %734 = vmatpush1.bf16.xpose.msra.mxu0 0
        %735 = vmatprep.subr.bf16.mxu0 0
        %736 = vmatpush1.bf16.xpose.msra.mxu0 0
        %737 = vmatprep.subr.bf16.mxu0 0
        %738 = vmatpush1.bf16.xpose.msra.mxu0 0
        %739 = vmatprep.subr.bf16.mxu0 0
        %740 = vmatpush1.bf16.xpose.msra.mxu0 0
        %741 = vmatprep.subr.bf16.mxu0 0
        %742 = vmatpush1.bf16.xpose.msra.mxu0 0
        %743 = vmatprep.mubr.bf16.mxu0 0
        %744 = vmatmul.mubr.bf16.gmra.mrb[0].mxu0 %v706
        %v745 = vpop.f32.mrb[0].mxu0
        %v746 = vadd.f32 0.0, %v745
        %v747 = vpop.f32.mrb[0].mxu0
        %v748 = vpop.f32.mrb[0].mxu0
        %v749 = vpop.f32.mrb[0].mxu0
        %750 = vdwg.mxu0
        %v751 = vsel %vm348, %v746, -inf
        %752 = vmax.xlane.f32.xlu0 %v751
        %v753 = vpop.xlane.xlu0 %752
        %v754 = vsub.f32 %v746, %v753
        %v755 = vmul.f32 %v754, 1.442695
        %v756 = vpow.pop %v755
        %v757 = vsel %vm348, %v756, 0.0
        %758 = vadd.xlane.f32.xlu0 %v757
        %v759 = vpop.xlane.xlu0 %758
        %v760 = vrcp.pop %v759
        %v761 = vmul.f32 %v756, %v760
        %v762 = vpack.c.bf16 %v761, %v761
        %763 = vrot.lane.b32.xlu0 %v700, 40
        %v764 = vpop.permute.xlu0 %763
        %v766 = vsel %vm348, %v762, 0
        %v769 = vsel %vm412, %v764, 0
        %771 = vmatprep.subr.bf16.mxu0 0
        %772 = vmatpush1.bf16.msra.mxu0 %v769
        %773 = vmatprep.subr.bf16.mxu0 0
        %774 = vmatpush1.bf16.msra.mxu0 0
        %775 = vmatprep.subr.bf16.mxu0 0
        %776 = vmatpush1.bf16.msra.mxu0 0
        %777 = vmatprep.subr.bf16.mxu0 0
        %778 = vmatpush1.bf16.msra.mxu0 0
        %779 = vmatprep.subr.bf16.mxu0 0
        %780 = vmatpush1.bf16.msra.mxu0 0
        %781 = vmatprep.subr.bf16.mxu0 0
        %782 = vmatpush1.bf16.msra.mxu0 0
        %783 = vmatprep.subr.bf16.mxu0 0
        %784 = vmatpush1.bf16.msra.mxu0 0
        %785 = vmatprep.subr.bf16.mxu0 0
        %786 = vmatpush1.bf16.msra.mxu0 0
        %787 = vmatprep.subr.bf16.mxu0 0
        %788 = vmatpush1.bf16.msra.mxu0 0
        %789 = vmatprep.subr.bf16.mxu0 0
        %790 = vmatpush1.bf16.msra.mxu0 0
        %791 = vmatprep.subr.bf16.mxu0 0
        %792 = vmatpush1.bf16.msra.mxu0 0
        %793 = vmatprep.subr.bf16.mxu0 0
        %794 = vmatpush1.bf16.msra.mxu0 0
        %795 = vmatprep.subr.bf16.mxu0 0
        %796 = vmatpush1.bf16.msra.mxu0 0
        %797 = vmatprep.subr.bf16.mxu0 0
        %798 = vmatpush1.bf16.msra.mxu0 0
        %799 = vmatprep.subr.bf16.mxu0 0
        %800 = vmatpush1.bf16.msra.mxu0 0
        %801 = vmatprep.subr.bf16.mxu0 0
        %802 = vmatpush1.bf16.msra.mxu0 0
        %803 = vmatprep.mubr.bf16.mxu0 0
        %804 = vmatmul.mubr.bf16.gmra.mrb[0].mxu0 %v766
        %v805 = vpop.f32.mrb[0].mxu0
        %v806 = vadd.f32 0.0, %v805
        %v807 = vpop.f32.mrb[0].mxu0
        %v808 = vpop.f32.mrb[0].mxu0
        %v809 = vpop.f32.mrb[0].mxu0
        %810 = vdwg.mxu0
        %812 = vrot.lane.b32.xlu0 %v806, 24
        %v813 = vpop.permute.xlu0 %812
        %vm815 = vcmask 261312
        %816 = vst.msk [vmem:[#allocation3] sm:$0xff] %vm815, %v813
        %v817 = vld [vmem:[#allocation3] sm:$0xff]
        %v818 = vpack.c.bf16 %v817, %v817
        %v819 = vld [vmem:[#allocation9] sm:$0xf]
        %v820 = vld [vmem:[#allocation9 + $0x4] sm:$0xf]
        %v821 = vld [vmem:[#allocation9 + $0x8] sm:$0xf]
        %v822 = vld [vmem:[#allocation9 + $0xc] sm:$0xf]
        %v823 = vld [vmem:[%s4] sm:$0x1]
        %v825 = vlaneseq
        %v826 = vshrl.u32 %v825, 7
        %v827 = vsub.s32 0, %v826
        %v828 = vrot.slane %v823, %v827
        %v834 = vunpack.c.l.b16 %v819
        %v835 = vunpack.c.l.b16 %v820
        %v836 = vunpack.c.l.b16 %v821
        %v837 = vunpack.c.l.b16 %v822
        %v838 = vpack.c.b16 %v835, %v834
        %v839 = vpack.c.b16 %v837, %v836
        %v843 = vsel %vm295, %v818, 0
        %845 = vmatprep.subr.bf16.mxu0 0
        %846 = vmatpush1.bf16.msra.mxu0 %v838
        %847 = vmatprep.subr.bf16.mxu0 0
        %848 = vmatpush1.bf16.msra.mxu0 %v839
        %849 = vmatprep.subr.bf16.mxu0 0
        %850 = vmatpush1.bf16.msra.mxu0 0
        %851 = vmatprep.subr.bf16.mxu0 0
        %852 = vmatpush1.bf16.msra.mxu0 0
        %853 = vmatprep.subr.bf16.mxu0 0
        %854 = vmatpush1.bf16.msra.mxu0 0
        %855 = vmatprep.subr.bf16.mxu0 0
        %856 = vmatpush1.bf16.msra.mxu0 0
        %857 = vmatprep.subr.bf16.mxu0 0
        %858 = vmatpush1.bf16.msra.mxu0 0
        %859 = vmatprep.subr.bf16.mxu0 0
        %860 = vmatpush1.bf16.msra.mxu0 0
        %861 = vmatprep.subr.bf16.mxu0 0
        %862 = vmatpush1.bf16.msra.mxu0 0
        %863 = vmatprep.subr.bf16.mxu0 0
        %864 = vmatpush1.bf16.msra.mxu0 0
        %865 = vmatprep.subr.bf16.mxu0 0
        %866 = vmatpush1.bf16.msra.mxu0 0
        %867 = vmatprep.subr.bf16.mxu0 0
        %868 = vmatpush1.bf16.msra.mxu0 0
        %869 = vmatprep.subr.bf16.mxu0 0
        %870 = vmatpush1.bf16.msra.mxu0 0
        %871 = vmatprep.subr.bf16.mxu0 0
        %872 = vmatpush1.bf16.msra.mxu0 0
        %873 = vmatprep.subr.bf16.mxu0 0
        %874 = vmatpush1.bf16.msra.mxu0 0
        %875 = vmatprep.subr.bf16.mxu0 0
        %876 = vmatpush1.bf16.msra.mxu0 0
        %877 = vmatprep.mubr.bf16.mxu0 0
        %878 = vmatmul.mubr.bf16.gmra.mrb[0].mxu0 %v843
        %v879 = vpop.f32.mrb[0].mxu0
        %v880 = vadd.f32 %v828, %v879
        %v881 = vpop.f32.mrb[0].mxu0
        %v882 = vpop.f32.mrb[0].mxu0
        %v883 = vpop.f32.mrb[0].mxu0
        %884 = vdwg.mxu0
        %885 = vst.msk [vmem:[%s268] sm:$0xff] %vm295, %v880
        %s886 = sand.u32 %s141, 1
        %s887 = scalar_lea.sflag [#allocation6], %s886
        %s888 = sand.u32 %s141, 1
        %s889 = smul.addr %s888, 8
        %s890 = scalar_lea.vmem [#allocation10], %s889
        // Predicated region
        $region53: #{tpu_custom_call.1} parent=39 // pred_check
          %p891 = pneg %p151
        $region54: #{tpu_custom_call.1} parent=39 // pred_check_branch
          %893 = sbr.rel (%p891) target = $region56
        $region55: #{tpu_custom_call.1} parent=39 // pred_region
          %s895 = ssub.s32 128, 128
          %896 = vsyncadd %s887, %s895
          %s897 = smul.addr %s23, 128
          %s898 = scalar_lea.hbm %s5, %s897
          %s900 = sshll.u32 %s890, 4
          %s901 = int_to_ptr.vmem [resolvable:$true] %s900
          %903 = dma.vmem_to_hbm [thread:$0]  %s901, 128, %s898, %s887
        $region56: #{tpu_custom_call.1} parent=39 // pred_fallthru
          _
      $region40: #{tpu_custom_call.1} parent=5 // pred_fallthru
        _
      %p904 = scmp.le.s32.totalorder 2, %s18
      // Predicated region
      $region57: #{tpu_custom_call.1} parent=5 // pred_check
        %p905 = pneg %p904
      $region58: #{tpu_custom_call.1} parent=5 // pred_check_branch
        %907 = sbr.rel (%p905) target = $region60
      $region59: #{tpu_custom_call.1} parent=5 // pred_region
        %s908 = ssub.s32 %s18, 2
        // Predicated region
        $region61: #{tpu_custom_call.1} parent=59 // pred_check
          %p909 = pneg %p157
        $region62: #{tpu_custom_call.1} parent=59 // pred_check_branch
          %911 = sbr.rel (%p909) target = $region64
        $region63: #{tpu_custom_call.1} parent=59 // pred_region
          %s912 = sand.u32 %s142, 1
          %s913 = scalar_lea.sflag [#allocation6], %s912
          %s914 = sand.u32 %s142, 1
          %s915 = smul.addr %s914, 8
          %s916 = scalar_lea.vmem [#allocation10], %s915
          %917 = dma.done %s913, 128
        $region64: #{tpu_custom_call.1} parent=59 // pred_fallthru
          _
      $region60: #{tpu_custom_call.1} parent=5 // pred_fallthru
        _
    $region6: #{tpu_custom_call.1} parent=1 // loop_footer
      %s22 = sadd.s32 1, %s18
    $region7: #{tpu_custom_call.1} parent=1 // loop_footer_branch
      %17 = sbr.rel target = $region3
    $region8: #{tpu_custom_call.1} parent=1 // loop_exit
      _
    %918 = vsyncpa [#allocation5], 1
    %s919 = scalar_lea.sflag [#allocation5], 1
    %920 = vsyncpa %s919, 1
    %921 = vsyncpa [#allocation8], 1
    %922 = vsyncpa [#allocation6], 1
    %s923 = scalar_lea.sflag [#allocation6], 1
    %924 = vsyncpa %s923, 1

</llo_original>
